<compile_context>
chip_gen: v6e
topology: v6e:2x2x1
jax: 0.10.0
libtpu: 0.0.40
codegen_flags: <defaults>
</compile_context>

<pallas_src>
import math

import jax
import jax.numpy as jnp
from jax.experimental import pallas as pl
from jax.experimental.pallas import tpu as pltpu

INPUT_SIZE = 2
HIDDEN = 128
CHUNK_B = 256          # lanes (batch rows) per in-kernel chunk: (128, 256) f32 = 32 vregs
DEFAULT_TILE_B = 8192  # max batch rows per grid step (amortizes per-step overhead)


def _cdiv(a, b):
    return -(-a // b)


def _round_up(a, m):
    return _cdiv(a, m) * m


def _discriminator_kernel(x_ref, w1t_ref, b1_ref, w2r_ref, b2_ref, o_ref):
    # x_ref:   (chunks_per_tile, INPUT_SIZE, CHUNK_B)  -- batch on lanes
    # w1t_ref: (HIDDEN, INPUT_SIZE)   == W1^T            (resident)
    # b1_ref:  (HIDDEN, 1)                               (resident)
    # w2r_ref: (8, HIDDEN)            == w2 row replicated over 8 sublanes (MXU LHS)
    # b2_ref:  (1, 1) in SMEM (scalar)
    # o_ref:   (chunks_per_tile, 1, CHUNK_B)             lane-dense output
    n_chunks = o_ref.shape[0]

    # Loop-invariant operands: loaded once per grid step, captured by the chunk loop.
    w1_cols = [w1t_ref[:, k:k + 1] for k in range(INPUT_SIZE)]   # (HIDDEN, 1) each
    b1 = b1_ref[...]                                             # (HIDDEN, 1)
    w2r = w2r_ref[...]                                           # (8, HIDDEN)
    b2 = b2_ref[0, 0]                                            # scalar from SMEM

    def chunk_body(c, carry):
        x_c = x_ref[c]                                           # (INPUT_SIZE, CHUNK_B)

        # First linear (K = 2) as VPU broadcast-FMAs:
        #   h^T[j, b] = sum_k W1[k, j] * x[b, k] + b1[j]
        acc = w1_cols[0] * x_c[0:1, :]                           # (H,1)*(1,CB) -> (H,CB)
        for k in range(1, INPUT_SIZE):
            acc = acc + w1_cols[k] * x_c[k:k + 1, :]
        h_t = jnp.maximum(acc + b1, 0.0)                         # ReLU, (HIDDEN, CHUNK_B)

        # Second linear (N = 1) on the otherwise-idle MXU; accumulate in f32.
        y = jnp.dot(w2r, h_t,
                    preferred_element_type=jnp.float32)[0:1, :] + b2   # (1, CHUNK_B)

        o_ref[c] = jax.nn.sigmoid(y).astype(o_ref.dtype)
        return carry

    jax.lax.fori_loop(0, n_chunks, chunk_body, 0, unroll=min(n_chunks, 8))


def _choose_tiling(B, max_tile_b=DEFAULT_TILE_B):
    """Pick (n_steps, tile_b).  Number of grid steps is chosen first so padding waste
    stays below CHUNK_B rows per step; >= 2 steps whenever the batch allows so a v7x
    chip can shard the ("parallel",) grid across both TensorCores."""
    n_steps = max(1, _cdiv(B, max_tile_b))
    if n_steps == 1 and B > CHUNK_B:
        n_steps = 2
    tile_b = _round_up(_cdiv(B, n_steps), CHUNK_B)
    return n_steps, tile_b


def discriminator_forward(x, w1, b1, w2, b2, *, max_tile_b=DEFAULT_TILE_B):
    """Forward pass of the Discriminator as a single Pallas TPU kernel.

    x  : [B, INPUT_SIZE] float32
    w1 : [INPUT_SIZE, HIDDEN]   (PyTorch weight.T)
    b1 : [HIDDEN]
    w2 : [HIDDEN, 1]            (PyTorch weight.T)
    b2 : [1]
    returns [B, 1] float32
    """
    B, D = x.shape
    assert D == INPUT_SIZE

    n_steps, tile_b = _choose_tiling(B, max_tile_b)
    B_pad = n_steps * tile_b
    chunks_total = B_pad // CHUNK_B
    chunks_per_tile = tile_b // CHUNK_B

    # Layout glue (plain XLA, outside the kernel): batch on the lane axis, pre-chunked.
    # (Feeding x already as (features, batch) from the producer would remove this
    # small transpose/pad dispatch entirely.)
    xT = jnp.pad(x.astype(jnp.float32).T, ((0, 0), (0, B_pad - B)))          # (2, B_pad)
    x3 = xT.reshape(INPUT_SIZE, chunks_total, CHUNK_B).transpose(1, 0, 2)    # (chunks, 2, CB)

    w1t = w1.astype(jnp.float32).T                                           # (HIDDEN, 2)
    b1c = b1.reshape(HIDDEN, 1).astype(jnp.float32)                          # (HIDDEN, 1)
    w2r = jnp.broadcast_to(w2.reshape(1, HIDDEN).astype(jnp.float32), (8, HIDDEN))
    b2s = b2.reshape(1, 1).astype(jnp.float32)                               # (1,1) -> SMEM

    out = pl.pallas_call(
        _discriminator_kernel,
        out_shape=jax.ShapeDtypeStruct((chunks_total, 1, CHUNK_B), jnp.float32),
        grid_spec=pltpu.PrefetchScalarGridSpec(
            num_scalar_prefetch=0,
            grid=(n_steps,),
            in_specs=[
                pl.BlockSpec((chunks_per_tile, INPUT_SIZE, CHUNK_B),
                             lambda i: (i, 0, 0)),                     # x tile (streamed)
                pl.BlockSpec((HIDDEN, INPUT_SIZE), lambda i: (0, 0)),  # W1^T   (resident)
                pl.BlockSpec((HIDDEN, 1), lambda i: (0, 0)),           # b1     (resident)
                pl.BlockSpec((8, HIDDEN), lambda i: (0, 0)),           # w2 rows (resident)
                pl.BlockSpec(memory_space=pltpu.MemorySpace.SMEM),     # b2 scalar
            ],
            out_specs=pl.BlockSpec((chunks_per_tile, 1, CHUNK_B),
                                   lambda i: (i, 0, 0)),               # lane-dense out
        ),
        compiler_params=pltpu.CompilerParams(
            dimension_semantics=("parallel",),
        ),
    )(x3, w1t, b1c, w2r, b2s)

    # Back to the PyTorch-style [B, 1] shape (drop batch padding).
    return out.reshape(B_pad)[:B].reshape(B, 1)


def init_params(key):
    """Deterministic init matching PyTorch nn.Linear defaults:
    U(-1/sqrt(fan_in), 1/sqrt(fan_in)) for both weights and biases."""
    k1, k2, k3, k4 = jax.random.split(key, 4)
    bound1 = 1.0 / math.sqrt(INPUT_SIZE)
    bound2 = 1.0 / math.sqrt(HIDDEN)
    w1 = jax.random.uniform(k1, (INPUT_SIZE, HIDDEN), jnp.float32, -bound1, bound1)
    b1 = jax.random.uniform(k2, (HIDDEN,), jnp.float32, -bound1, bound1)
    w2 = jax.random.uniform(k3, (HIDDEN, 1), jnp.float32, -bound2, bound2)
    b2 = jax.random.uniform(k4, (1,), jnp.float32, -bound2, bound2)
    return w1, b1, w2, b2


def reference_forward(x, w1, b1, w2, b2):
    h = jnp.maximum(jnp.dot(x, w1, precision=jax.lax.Precision.HIGHEST) + b1, 0.0)
    return jax.nn.sigmoid(jnp.dot(h, w2, precision=jax.lax.Precision.HIGHEST) + b2)


if __name__ == "__main__":
    key = jax.random.PRNGKey(0)
    kx, kx2, kp = jax.random.split(key, 3)
    w1, b1, w2, b2 = init_params(kp)

    # Tolerance is generous enough to absorb MXU f32-matmul precision modes while still
    # catching any structural bug (sigmoid outputs live in (0, 1)).
    ATOL = RTOL = 5e-3

    # Small batch (single grid step, single 256-lane chunk).
    batch = 8
    x = jax.random.normal(kx, (batch, INPUT_SIZE), jnp.float32)
    out = jax.block_until_ready(discriminator_forward(x, w1, b1, w2, b2))
    ref = reference_forward(x, w1, b1, w2, b2)
    assert out.shape == (batch, 1)
    assert jnp.allclose(out, ref, atol=ATOL, rtol=RTOL), "mismatch vs. JAX reference (small batch)"

    # Larger, non-multiple batch: exercises padding, the 2-step pipelined/parallel grid,
    # and the in-kernel chunk loop (9 chunks per tile, partial unroll).
    batch2 = 4103
    x2 = jax.random.normal(kx2, (batch2, INPUT_SIZE), jnp.float32)
    out2 = jax.block_until_ready(discriminator_forward(x2, w1, b1, w2, b2))
    ref2 = reference_forward(x2, w1, b1, w2, b2)
    assert out2.shape == (batch2, 1)
    assert jnp.allclose(out2, ref2, atol=ATOL, rtol=RTOL), "mismatch vs. JAX reference (large batch)"

    print("KERNEL_OK")
</pallas_src>

<mosaic_0001>
module attributes {stable_mosaic.version = 11 : i64} {
  func.func @_discriminator_kernel(%arg0: i32, %arg1: memref<1x2x256xf32, #tpu.memory_space<vmem>>, %arg2: memref<128x2xf32, #tpu.memory_space<vmem>>, %arg3: memref<128x1xf32, #tpu.memory_space<vmem>>, %arg4: memref<8x128xf32, #tpu.memory_space<vmem>>, %arg5: memref<1x1xf32, #tpu.memory_space<smem>>, %arg6: memref<1x1x256xf32, #tpu.memory_space<vmem>>) attributes {dimension_semantics = [#tpu.dimension_semantics<parallel>], iteration_bounds = array<i64: 1>, scalar_prefetch = 0 : i64, scratch_operands = 0 : i64, tpu.core_type = #tpu.core_type<tc>, window_params = [{transform_indices = @transform_0, window_bounds = array<i64: 1, 2, 256>}, {pipeline_mode = #tpu.pipeline_mode<synchronous>, transform_indices = @transform_1, window_bounds = array<i64: 128, 2>}, {pipeline_mode = #tpu.pipeline_mode<synchronous>, transform_indices = @transform_2, window_bounds = array<i64: 128, 1>}, {pipeline_mode = #tpu.pipeline_mode<synchronous>, transform_indices = @transform_3, window_bounds = array<i64: 8, 128>}, {transform_indices = @transform_4, window_bounds = array<i64: 1, 1>}, {transform_indices = @transform_5, window_bounds = array<i64: 1, 1, 256>}]} {
    %c0 = arith.constant 0 : index
    %c0_0 = arith.constant 0 : index
    %0 = vector.load %arg2[%c0, %c0_0] : memref<128x2xf32, #tpu.memory_space<vmem>>, vector<128x1xf32>
    %c0_1 = arith.constant 0 : index
    %c1 = arith.constant 1 : index
    %1 = vector.load %arg2[%c0_1, %c1] : memref<128x2xf32, #tpu.memory_space<vmem>>, vector<128x1xf32>
    %c0_2 = arith.constant 0 : index
    %c0_3 = arith.constant 0 : index
    %2 = vector.load %arg3[%c0_2, %c0_3] : memref<128x1xf32, #tpu.memory_space<vmem>>, vector<128x1xf32>
    %c0_4 = arith.constant 0 : index
    %c0_5 = arith.constant 0 : index
    %3 = vector.load %arg4[%c0_4, %c0_5] : memref<8x128xf32, #tpu.memory_space<vmem>>, vector<8x128xf32>
    %c0_6 = arith.constant 0 : index
    %c0_7 = arith.constant 0 : index
    %4 = memref.load %arg5[%c0_6, %c0_7] : memref<1x1xf32, #tpu.memory_space<smem>>
    %c0_i32 = arith.constant 0 : i32
    %5 = arith.index_cast %c0_i32 : i32 to index
    %c0_8 = arith.constant 0 : index
    %c0_9 = arith.constant 0 : index
    %6 = vector.load %arg1[%5, %c0_8, %c0_9] : memref<1x2x256xf32, #tpu.memory_space<vmem>>, vector<1x2x256xf32>
    %7 = vector.shape_cast %6 : vector<1x2x256xf32> to vector<2x256xf32>
    %8 = vector.extract_strided_slice %7 {offsets = [0, 0], sizes = [1, 256], strides = [1, 1]} : vector<2x256xf32> to vector<1x256xf32>
    %9 = vector.broadcast %0 : vector<128x1xf32> to vector<128x256xf32>
    %10 = vector.broadcast %8 : vector<1x256xf32> to vector<128x256xf32>
    %11 = arith.mulf %9, %10 : vector<128x256xf32>
    %12 = vector.extract_strided_slice %7 {offsets = [1, 0], sizes = [1, 256], strides = [1, 1]} : vector<2x256xf32> to vector<1x256xf32>
    %13 = vector.broadcast %1 : vector<128x1xf32> to vector<128x256xf32>
    %14 = vector.broadcast %12 : vector<1x256xf32> to vector<128x256xf32>
    %15 = arith.mulf %13, %14 : vector<128x256xf32>
    %16 = arith.addf %11, %15 : vector<128x256xf32>
    %17 = vector.broadcast %2 : vector<128x1xf32> to vector<128x256xf32>
    %18 = arith.addf %16, %17 : vector<128x256xf32>
    %cst = arith.constant 0.000000e+00 : f32
    %19 = vector.broadcast %cst : f32 to vector<128x256xf32>
    %20 = arith.maximumf %18, %19 : vector<128x256xf32>
    %cst_10 = arith.constant dense<0.000000e+00> : vector<8x256xf32>
    %21 = tpu.matmul %3, %20, %cst_10 {dimension_numbers = #tpu.dot_dimension_numbers<[1], [0], [0], [1], [0, 0, 1, 1], [], []>} : vector<8x128xf32>, vector<128x256xf32>, vector<8x256xf32> -> vector<8x256xf32>
    %22 = vector.extract_strided_slice %21 {offsets = [0, 0], sizes = [1, 256], strides = [1, 1]} : vector<8x256xf32> to vector<1x256xf32>
    %23 = vector.broadcast %4 : f32 to vector<1x256xf32>
    %24 = arith.addf %22, %23 : vector<1x256xf32>
    %25 = arith.negf %24 : vector<1x256xf32>
    %26 = math.exp %25 : vector<1x256xf32>
    %cst_11 = arith.constant 1.000000e+00 : f32
    %27 = vector.broadcast %cst_11 : f32 to vector<1x256xf32>
    %28 = arith.addf %27, %26 : vector<1x256xf32>
    %29 = arith.divf %27, %28 : vector<1x256xf32>
    %30 = arith.index_cast %c0_i32 : i32 to index
    %c0_12 = arith.constant 0 : index
    %c0_13 = arith.constant 0 : index
    %31 = vector.load %arg6[%30, %c0_12, %c0_13] : memref<1x1x256xf32, #tpu.memory_space<vmem>>, vector<1x1x256xf32>
    %32 = vector.shape_cast %31 : vector<1x1x256xf32> to vector<1x256xf32>
    %33 = vector.shape_cast %29 : vector<1x256xf32> to vector<1x1x256xf32>
    tpu.vector_store %arg6[%30, %c0_12, %c0_13], %33 {strides = array<i32>} : memref<1x1x256xf32, #tpu.memory_space<vmem>>, vector<1x1x256xf32>,
    %c1_i32 = arith.constant 1 : i32
    return
  }
  func.func @transform_0(%arg0: i32) -> (i32, i32, i32) {
    %c0_i32 = arith.constant 0 : i32
    %c0_i32_0 = arith.constant 0 : i32
    %c0_i32_1 = arith.constant 0 : i32
    return %arg0, %c0_i32, %c0_i32_0 : i32, i32, i32
  }
  func.func @transform_1(%arg0: i32) -> (i32, i32) {
    %c0_i32 = arith.constant 0 : i32
    %c0_i32_0 = arith.constant 0 : i32
    %c0_i32_1 = arith.constant 0 : i32
    return %c0_i32, %c0_i32_0 : i32, i32
  }
  func.func @transform_2(%arg0: i32) -> (i32, i32) {
    %c0_i32 = arith.constant 0 : i32
    %c0_i32_0 = arith.constant 0 : i32
    %c0_i32_1 = arith.constant 0 : i32
    return %c0_i32, %c0_i32_0 : i32, i32
  }
  func.func @transform_3(%arg0: i32) -> (i32, i32) {
    %c0_i32 = arith.constant 0 : i32
    %c0_i32_0 = arith.constant 0 : i32
    %c0_i32_1 = arith.constant 0 : i32
    return %c0_i32, %c0_i32_0 : i32, i32
  }
  func.func @transform_4(%arg0: i32) -> (i32, i32) {
    %c0_i32 = arith.constant 0 : i32
    %c0_i32_0 = arith.constant 0 : i32
    %c0_i32_1 = arith.constant 0 : i32
    return %c0_i32, %c0_i32_0 : i32, i32
  }
  func.func @transform_5(%arg0: i32) -> (i32, i32, i32) {
    %c0_i32 = arith.constant 0 : i32
    %c0_i32_0 = arith.constant 0 : i32
    %c0_i32_1 = arith.constant 0 : i32
    return %arg0, %c0_i32, %c0_i32_0 : i32, i32, i32
  }
}

</mosaic_0001>

<llo_original>
// kernel: tpu_custom_call.1
$region0: #{tpu_custom_call.1}
  #allocation0 [shape = 'u32[]', space=smem, size = 0x4, offset = 0x4, fixed_abs, tag = 'smem constant byte address 0x4 - core index']
  #allocation1 [shape = 'u32[144,128]{1,0:T(1,128)}', space=vmem, size = 0x12000, scoped, tag = 'internal scratch']
  #allocation2 [shape = 'f32[1,1]{1,0:T(1,128)S(6)}', space=smem, size = 0x200, scoped, tag = 'scoped memory for tpu_custom_call.1']
  %s0 = inlined_call_operand.vmem [shape: f32[1,2,256], index: 0, kind: input, shape index: {}]
  %s1 = inlined_call_operand.vmem [shape: f32[128,2], index: 1, kind: input, shape index: {}]
  %s2 = inlined_call_operand.vmem [shape: f32[128,1], index: 2, kind: input, shape index: {}]
  %s3 = inlined_call_operand.vmem [shape: f32[8,128], index: 3, kind: input, shape index: {}]
  %s4 = inlined_call_operand.<no memory space> [shape: f32[1,1], index: 4, kind: input, shape index: {}]
  %s5 = inlined_call_operand.hbm [shape: f32[1,1,256], index: 5, kind: output, shape index: {}]
  %s6 = sld [smem:[#allocation0]]
  $region30: #{tpu_custom_call.1} parent=0
    _
  %s8 = ssub.s32 1, %s6
  %s9 = scalar_select 0, %s8, %s6
  %10 = sst [smem:[#allocation2]] %s4
  $region1: #{tpu_custom_call.1} parent=0
    #allocation3 [shape = 'u8[1024]{0}', space=vmem, size = 0x400, scoped, tag = 'output window, operand 0, single buffered']
    #allocation4 [shape = 's32[1]{0}', space=sflag, size = 0x4, scoped, tag = 'scoped memory for tpu_custom_call.1']
    %11 = vsyncpa [#allocation4], 0
    // Predicated region
    $region2: #{tpu_custom_call.1} parent=1 // pred_check
      _
    $region3: #{tpu_custom_call.1} parent=1 // pred_check_branch
      %13 = sbr.rel (0) target = $region5
    $region4: #{tpu_custom_call.1} parent=1 // pred_region
      _
    $region5: #{tpu_custom_call.1} parent=1 // pred_fallthru
      _
    // Predicated region
    $region6: #{tpu_custom_call.1} parent=1 // pred_check
      _
    $region7: #{tpu_custom_call.1} parent=1 // pred_check_branch
      %15 = sbr.rel (0) target = $region9
    $region8: #{tpu_custom_call.1} parent=1 // pred_region
      _
    $region9: #{tpu_custom_call.1} parent=1 // pred_fallthru
      _
    // Predicated region
    $region10: #{tpu_custom_call.1} parent=1 // pred_check
      _
    $region11: #{tpu_custom_call.1} parent=1 // pred_check_branch
      %17 = sbr.rel (0) target = $region13
    $region12: #{tpu_custom_call.1} parent=1 // pred_region
      _
    $region13: #{tpu_custom_call.1} parent=1 // pred_fallthru
      _
    // Predicated region
    $region14: #{tpu_custom_call.1} parent=1 // pred_check
      _
    $region15: #{tpu_custom_call.1} parent=1 // pred_check_branch
      %19 = sbr.rel (0) target = $region17
    $region16: #{tpu_custom_call.1} parent=1 // pred_region
      _
    $region17: #{tpu_custom_call.1} parent=1 // pred_fallthru
      _
    // Predicated region
    $region18: #{tpu_custom_call.1} parent=1 // pred_check
      _
    $region19: #{tpu_custom_call.1} parent=1 // pred_check_branch
      %21 = sbr.rel (0) target = $region21
    $region20: #{tpu_custom_call.1} parent=1 // pred_region
      _
    $region21: #{tpu_custom_call.1} parent=1 // pred_fallthru
      _
    %v22 = vld [vmem:[%s1] sm:$0xff]
    %v23 = vld [vmem:[%s1 + $0x8] sm:$0xff]
    %v24 = vld [vmem:[%s1 + $0x10] sm:$0xff]
    %v25 = vld [vmem:[%s1 + $0x18] sm:$0xff]
    %v26 = vld [vmem:[%s1 + $0x20] sm:$0xff]
    %v27 = vld [vmem:[%s1 + $0x28] sm:$0xff]
    %v28 = vld [vmem:[%s1 + $0x30] sm:$0xff]
    %v29 = vld [vmem:[%s1 + $0x38] sm:$0xff]
    %v30 = vld [vmem:[%s1 + $0x40] sm:$0xff]
    %v31 = vld [vmem:[%s1 + $0x48] sm:$0xff]
    %v32 = vld [vmem:[%s1 + $0x50] sm:$0xff]
    %v33 = vld [vmem:[%s1 + $0x58] sm:$0xff]
    %v34 = vld [vmem:[%s1 + $0x60] sm:$0xff]
    %v35 = vld [vmem:[%s1 + $0x68] sm:$0xff]
    %v36 = vld [vmem:[%s1 + $0x70] sm:$0xff]
    %v37 = vld [vmem:[%s1 + $0x78] sm:$0xff]
    %v38 = vld [vmem:[%s2] sm:$0xff]
    %v39 = vld [vmem:[%s2 + $0x8] sm:$0xff]
    %v40 = vld [vmem:[%s2 + $0x10] sm:$0xff]
    %v41 = vld [vmem:[%s2 + $0x18] sm:$0xff]
    %v42 = vld [vmem:[%s2 + $0x20] sm:$0xff]
    %v43 = vld [vmem:[%s2 + $0x28] sm:$0xff]
    %v44 = vld [vmem:[%s2 + $0x30] sm:$0xff]
    %v45 = vld [vmem:[%s2 + $0x38] sm:$0xff]
    %v46 = vld [vmem:[%s2 + $0x40] sm:$0xff]
    %v47 = vld [vmem:[%s2 + $0x48] sm:$0xff]
    %v48 = vld [vmem:[%s2 + $0x50] sm:$0xff]
    %v49 = vld [vmem:[%s2 + $0x58] sm:$0xff]
    %v50 = vld [vmem:[%s2 + $0x60] sm:$0xff]
    %v51 = vld [vmem:[%s2 + $0x68] sm:$0xff]
    %v52 = vld [vmem:[%s2 + $0x70] sm:$0xff]
    %v53 = vld [vmem:[%s2 + $0x78] sm:$0xff]
    %v54 = vld [vmem:[%s3] sm:$0xff]
    %s55 = sld [smem:[#allocation2]]
    %v56 = vld [vmem:[%s0] sm:$0xf]
    %58 = vset.pattern.permute.xlu0 0
    %59 = vperm.xlu0 %58, %v22
    %v60 = vpop.permute.xlu0 %59
    %63 = vset.pattern.permute.xlu0 0
    %64 = vperm.xlu0 %63, %v23
    %v65 = vpop.permute.xlu0 %64
    %68 = vset.pattern.permute.xlu0 0
    %69 = vperm.xlu0 %68, %v24
    %v70 = vpop.permute.xlu0 %69
    %73 = vset.pattern.permute.xlu0 0
    %74 = vperm.xlu0 %73, %v25
    %v75 = vpop.permute.xlu0 %74
    %78 = vset.pattern.permute.xlu0 0
    %79 = vperm.xlu0 %78, %v26
    %v80 = vpop.permute.xlu0 %79
    %83 = vset.pattern.permute.xlu0 0
    %84 = vperm.xlu0 %83, %v27
    %v85 = vpop.permute.xlu0 %84
    %88 = vset.pattern.permute.xlu0 0
    %89 = vperm.xlu0 %88, %v28
    %v90 = vpop.permute.xlu0 %89
    %93 = vset.pattern.permute.xlu0 0
    %94 = vperm.xlu0 %93, %v29
    %v95 = vpop.permute.xlu0 %94
    %98 = vset.pattern.permute.xlu0 0
    %99 = vperm.xlu0 %98, %v30
    %v100 = vpop.permute.xlu0 %99
    %103 = vset.pattern.permute.xlu0 0
    %104 = vperm.xlu0 %103, %v31
    %v105 = vpop.permute.xlu0 %104
    %108 = vset.pattern.permute.xlu0 0
    %109 = vperm.xlu0 %108, %v32
    %v110 = vpop.permute.xlu0 %109
    %113 = vset.pattern.permute.xlu0 0
    %114 = vperm.xlu0 %113, %v33
    %v115 = vpop.permute.xlu0 %114
    %118 = vset.pattern.permute.xlu0 0
    %119 = vperm.xlu0 %118, %v34
    %v120 = vpop.permute.xlu0 %119
    %123 = vset.pattern.permute.xlu0 0
    %124 = vperm.xlu0 %123, %v35
    %v125 = vpop.permute.xlu0 %124
    %128 = vset.pattern.permute.xlu0 0
    %129 = vperm.xlu0 %128, %v36
    %v130 = vpop.permute.xlu0 %129
    %133 = vset.pattern.permute.xlu0 0
    %134 = vperm.xlu0 %133, %v37
    %v135 = vpop.permute.xlu0 %134
    %v138 = vlaneseq
    %v139 = vshrl.u32 %v138, 7
    %v140 = vsub.s32 0, %v139
    %v141 = vrot.slane %v56, %v140
    %v142 = vlaneseq
    %v143 = vshrl.u32 %v142, 7
    %v144 = vsub.s32 2, %v143
    %v145 = vrot.slane %v56, %v144
    %v148 = vlaneseq
    %v149 = vshrl.u32 %v148, 7
    %v150 = vsub.s32 0, %v149
    %v151 = vrot.slane %v141, %v150
    %v152 = vlaneseq
    %v153 = vshrl.u32 %v152, 7
    %v154 = vsub.s32 0, %v153
    %v155 = vrot.slane %v145, %v154
    %v156 = vmul.f32 %v60, %v151
    %v157 = vmul.f32 %v60, %v155
    %v158 = vmul.f32 %v65, %v151
    %v159 = vmul.f32 %v65, %v155
    %v160 = vmul.f32 %v70, %v151
    %v161 = vmul.f32 %v70, %v155
    %v162 = vmul.f32 %v75, %v151
    %v163 = vmul.f32 %v75, %v155
    %v164 = vmul.f32 %v80, %v151
    %v165 = vmul.f32 %v80, %v155
    %v166 = vmul.f32 %v85, %v151
    %v167 = vmul.f32 %v85, %v155
    %v168 = vmul.f32 %v90, %v151
    %v169 = vmul.f32 %v90, %v155
    %v170 = vmul.f32 %v95, %v151
    %v171 = vmul.f32 %v95, %v155
    %v172 = vmul.f32 %v100, %v151
    %v173 = vmul.f32 %v100, %v155
    %v174 = vmul.f32 %v105, %v151
    %v175 = vmul.f32 %v105, %v155
    %v176 = vmul.f32 %v110, %v151
    %v177 = vmul.f32 %v110, %v155
    %v178 = vmul.f32 %v115, %v151
    %v179 = vmul.f32 %v115, %v155
    %v180 = vmul.f32 %v120, %v151
    %v181 = vmul.f32 %v120, %v155
    %v182 = vmul.f32 %v125, %v151
    %v183 = vmul.f32 %v125, %v155
    %v184 = vmul.f32 %v130, %v151
    %v185 = vmul.f32 %v130, %v155
    %v186 = vmul.f32 %v135, %v151
    %v187 = vmul.f32 %v135, %v155
    %188 = vset.pattern.permute.xlu0 1
    %189 = vperm.xlu0 %188, %v22
    %v190 = vpop.permute.xlu0 %189
    %192 = vset.pattern.permute.xlu0 1
    %193 = vperm.xlu0 %192, %v23
    %v194 = vpop.permute.xlu0 %193
    %196 = vset.pattern.permute.xlu0 1
    %197 = vperm.xlu0 %196, %v24
    %v198 = vpop.permute.xlu0 %197
    %200 = vset.pattern.permute.xlu0 1
    %201 = vperm.xlu0 %200, %v25
    %v202 = vpop.permute.xlu0 %201
    %204 = vset.pattern.permute.xlu0 1
    %205 = vperm.xlu0 %204, %v26
    %v206 = vpop.permute.xlu0 %205
    %208 = vset.pattern.permute.xlu0 1
    %209 = vperm.xlu0 %208, %v27
    %v210 = vpop.permute.xlu0 %209
    %212 = vset.pattern.permute.xlu0 1
    %213 = vperm.xlu0 %212, %v28
    %v214 = vpop.permute.xlu0 %213
    %216 = vset.pattern.permute.xlu0 1
    %217 = vperm.xlu0 %216, %v29
    %v218 = vpop.permute.xlu0 %217
    %220 = vset.pattern.permute.xlu0 1
    %221 = vperm.xlu0 %220, %v30
    %v222 = vpop.permute.xlu0 %221
    %224 = vset.pattern.permute.xlu0 1
    %225 = vperm.xlu0 %224, %v31
    %v226 = vpop.permute.xlu0 %225
    %228 = vset.pattern.permute.xlu0 1
    %229 = vperm.xlu0 %228, %v32
    %v230 = vpop.permute.xlu0 %229
    %232 = vset.pattern.permute.xlu0 1
    %233 = vperm.xlu0 %232, %v33
    %v234 = vpop.permute.xlu0 %233
    %236 = vset.pattern.permute.xlu0 1
    %237 = vperm.xlu0 %236, %v34
    %v238 = vpop.permute.xlu0 %237
    %240 = vset.pattern.permute.xlu0 1
    %241 = vperm.xlu0 %240, %v35
    %v242 = vpop.permute.xlu0 %241
    %244 = vset.pattern.permute.xlu0 1
    %245 = vperm.xlu0 %244, %v36
    %v246 = vpop.permute.xlu0 %245
    %248 = vset.pattern.permute.xlu0 1
    %249 = vperm.xlu0 %248, %v37
    %v250 = vpop.permute.xlu0 %249
    %v252 = vlaneseq
    %v253 = vshrl.u32 %v252, 7
    %v254 = vsub.s32 1, %v253
    %v255 = vrot.slane %v56, %v254
    %v256 = vlaneseq
    %v257 = vshrl.u32 %v256, 7
    %v258 = vsub.s32 3, %v257
    %v259 = vrot.slane %v56, %v258
    %v262 = vlaneseq
    %v263 = vshrl.u32 %v262, 7
    %v264 = vsub.s32 1, %v263
    %v265 = vrot.slane %v255, %v264
    %v266 = vlaneseq
    %v267 = vshrl.u32 %v266, 7
    %v268 = vsub.s32 1, %v267
    %v269 = vrot.slane %v259, %v268
    %v270 = vmul.f32 %v190, %v265
    %v271 = vmul.f32 %v190, %v269
    %v272 = vmul.f32 %v194, %v265
    %v273 = vmul.f32 %v194, %v269
    %v274 = vmul.f32 %v198, %v265
    %v275 = vmul.f32 %v198, %v269
    %v276 = vmul.f32 %v202, %v265
    %v277 = vmul.f32 %v202, %v269
    %v278 = vmul.f32 %v206, %v265
    %v279 = vmul.f32 %v206, %v269
    %v280 = vmul.f32 %v210, %v265
    %v281 = vmul.f32 %v210, %v269
    %v282 = vmul.f32 %v214, %v265
    %v283 = vmul.f32 %v214, %v269
    %v284 = vmul.f32 %v218, %v265
    %v285 = vmul.f32 %v218, %v269
    %v286 = vmul.f32 %v222, %v265
    %v287 = vmul.f32 %v222, %v269
    %v288 = vmul.f32 %v226, %v265
    %v289 = vmul.f32 %v226, %v269
    %v290 = vmul.f32 %v230, %v265
    %v291 = vmul.f32 %v230, %v269
    %v292 = vmul.f32 %v234, %v265
    %v293 = vmul.f32 %v234, %v269
    %v294 = vmul.f32 %v238, %v265
    %v295 = vmul.f32 %v238, %v269
    %v296 = vmul.f32 %v242, %v265
    %v297 = vmul.f32 %v242, %v269
    %v298 = vmul.f32 %v246, %v265
    %v299 = vmul.f32 %v246, %v269
    %v300 = vmul.f32 %v250, %v265
    %v301 = vmul.f32 %v250, %v269
    %v302 = vadd.f32 %v156, %v270
    %v303 = vadd.f32 %v157, %v271
    %v304 = vadd.f32 %v158, %v272
    %v305 = vadd.f32 %v159, %v273
    %v306 = vadd.f32 %v160, %v274
    %v307 = vadd.f32 %v161, %v275
    %v308 = vadd.f32 %v162, %v276
    %v309 = vadd.f32 %v163, %v277
    %v310 = vadd.f32 %v164, %v278
    %v311 = vadd.f32 %v165, %v279
    %v312 = vadd.f32 %v166, %v280
    %v313 = vadd.f32 %v167, %v281
    %v314 = vadd.f32 %v168, %v282
    %v315 = vadd.f32 %v169, %v283
    %v316 = vadd.f32 %v170, %v284
    %v317 = vadd.f32 %v171, %v285
    %v318 = vadd.f32 %v172, %v286
    %v319 = vadd.f32 %v173, %v287
    %v320 = vadd.f32 %v174, %v288
    %v321 = vadd.f32 %v175, %v289
    %v322 = vadd.f32 %v176, %v290
    %v323 = vadd.f32 %v177, %v291
    %v324 = vadd.f32 %v178, %v292
    %v325 = vadd.f32 %v179, %v293
    %v326 = vadd.f32 %v180, %v294
    %v327 = vadd.f32 %v181, %v295
    %v328 = vadd.f32 %v182, %v296
    %v329 = vadd.f32 %v183, %v297
    %v330 = vadd.f32 %v184, %v298
    %v331 = vadd.f32 %v185, %v299
    %v332 = vadd.f32 %v186, %v300
    %v333 = vadd.f32 %v187, %v301
    %335 = vset.pattern.permute.xlu0 0
    %336 = vperm.xlu0 %335, %v38
    %v337 = vpop.permute.xlu0 %336
    %340 = vset.pattern.permute.xlu0 0
    %341 = vperm.xlu0 %340, %v39
    %v342 = vpop.permute.xlu0 %341
    %345 = vset.pattern.permute.xlu0 0
    %346 = vperm.xlu0 %345, %v40
    %v347 = vpop.permute.xlu0 %346
    %350 = vset.pattern.permute.xlu0 0
    %351 = vperm.xlu0 %350, %v41
    %v352 = vpop.permute.xlu0 %351
    %355 = vset.pattern.permute.xlu0 0
    %356 = vperm.xlu0 %355, %v42
    %v357 = vpop.permute.xlu0 %356
    %360 = vset.pattern.permute.xlu0 0
    %361 = vperm.xlu0 %360, %v43
    %v362 = vpop.permute.xlu0 %361
    %365 = vset.pattern.permute.xlu0 0
    %366 = vperm.xlu0 %365, %v44
    %v367 = vpop.permute.xlu0 %366
    %370 = vset.pattern.permute.xlu0 0
    %371 = vperm.xlu0 %370, %v45
    %v372 = vpop.permute.xlu0 %371
    %375 = vset.pattern.permute.xlu0 0
    %376 = vperm.xlu0 %375, %v46
    %v377 = vpop.permute.xlu0 %376
    %380 = vset.pattern.permute.xlu0 0
    %381 = vperm.xlu0 %380, %v47
    %v382 = vpop.permute.xlu0 %381
    %385 = vset.pattern.permute.xlu0 0
    %386 = vperm.xlu0 %385, %v48
    %v387 = vpop.permute.xlu0 %386
    %390 = vset.pattern.permute.xlu0 0
    %391 = vperm.xlu0 %390, %v49
    %v392 = vpop.permute.xlu0 %391
    %395 = vset.pattern.permute.xlu0 0
    %396 = vperm.xlu0 %395, %v50
    %v397 = vpop.permute.xlu0 %396
    %400 = vset.pattern.permute.xlu0 0
    %401 = vperm.xlu0 %400, %v51
    %v402 = vpop.permute.xlu0 %401
    %405 = vset.pattern.permute.xlu0 0
    %406 = vperm.xlu0 %405, %v52
    %v407 = vpop.permute.xlu0 %406
    %410 = vset.pattern.permute.xlu0 0
    %411 = vperm.xlu0 %410, %v53
    %v412 = vpop.permute.xlu0 %411
    %v414 = vadd.f32 %v302, %v337
    %v415 = vadd.f32 %v303, %v337
    %v416 = vadd.f32 %v304, %v342
    %v417 = vadd.f32 %v305, %v342
    %v418 = vadd.f32 %v306, %v347
    %v419 = vadd.f32 %v307, %v347
    %v420 = vadd.f32 %v308, %v352
    %v421 = vadd.f32 %v309, %v352
    %v422 = vadd.f32 %v310, %v357
    %v423 = vadd.f32 %v311, %v357
    %v424 = vadd.f32 %v312, %v362
    %v425 = vadd.f32 %v313, %v362
    %v426 = vadd.f32 %v314, %v367
    %v427 = vadd.f32 %v315, %v367
    %v428 = vadd.f32 %v316, %v372
    %v429 = vadd.f32 %v317, %v372
    %v430 = vadd.f32 %v318, %v377
    %v431 = vadd.f32 %v319, %v377
    %v432 = vadd.f32 %v320, %v382
    %v433 = vadd.f32 %v321, %v382
    %v434 = vadd.f32 %v322, %v387
    %v435 = vadd.f32 %v323, %v387
    %v436 = vadd.f32 %v324, %v392
    %v437 = vadd.f32 %v325, %v392
    %v438 = vadd.f32 %v326, %v397
    %v439 = vadd.f32 %v327, %v397
    %v440 = vadd.f32 %v328, %v402
    %v441 = vadd.f32 %v329, %v402
    %v442 = vadd.f32 %v330, %v407
    %v443 = vadd.f32 %v331, %v407
    %v444 = vadd.f32 %v332, %v412
    %v445 = vadd.f32 %v333, %v412
    %v446 = vmax.f32 %v414, 0.0
    %v447 = vmax.f32 %v415, 0.0
    %v448 = vmax.f32 %v416, 0.0
    %v449 = vmax.f32 %v417, 0.0
    %v450 = vmax.f32 %v418, 0.0
    %v451 = vmax.f32 %v419, 0.0
    %v452 = vmax.f32 %v420, 0.0
    %v453 = vmax.f32 %v421, 0.0
    %v454 = vmax.f32 %v422, 0.0
    %v455 = vmax.f32 %v423, 0.0
    %v456 = vmax.f32 %v424, 0.0
    %v457 = vmax.f32 %v425, 0.0
    %v458 = vmax.f32 %v426, 0.0
    %v459 = vmax.f32 %v427, 0.0
    %v460 = vmax.f32 %v428, 0.0
    %v461 = vmax.f32 %v429, 0.0
    %v462 = vmax.f32 %v430, 0.0
    %v463 = vmax.f32 %v431, 0.0
    %v464 = vmax.f32 %v432, 0.0
    %v465 = vmax.f32 %v433, 0.0
    %v466 = vmax.f32 %v434, 0.0
    %v467 = vmax.f32 %v435, 0.0
    %v468 = vmax.f32 %v436, 0.0
    %v469 = vmax.f32 %v437, 0.0
    %v470 = vmax.f32 %v438, 0.0
    %v471 = vmax.f32 %v439, 0.0
    %v472 = vmax.f32 %v440, 0.0
    %v473 = vmax.f32 %v441, 0.0
    %v474 = vmax.f32 %v442, 0.0
    %v475 = vmax.f32 %v443, 0.0
    %v476 = vmax.f32 %v444, 0.0
    %v477 = vmax.f32 %v445, 0.0
    %478 = vmatprep.subr.mxu0 %v477
    %479 = vmatpush1.msra.mxu0 %v476
    %480 = vmatprep.subr.mxu0 %v475
    %481 = vmatpush1.msra.mxu0 %v474
    %482 = vmatprep.subr.mxu0 %v473
    %483 = vmatpush1.msra.mxu0 %v472
    %484 = vmatprep.subr.mxu0 %v471
    %485 = vmatpush1.msra.mxu0 %v470
    %486 = vmatprep.subr.mxu0 %v469
    %487 = vmatpush1.msra.mxu0 %v468
    %488 = vmatprep.subr.mxu0 %v467
    %489 = vmatpush1.msra.mxu0 %v466
    %490 = vmatprep.subr.mxu0 %v465
    %491 = vmatpush1.msra.mxu0 %v464
    %492 = vmatprep.subr.mxu0 %v463
    %493 = vmatpush1.msra.mxu0 %v462
    %494 = vmatprep.subr.mxu0 %v461
    %495 = vmatpush1.msra.mxu0 %v460
    %496 = vmatprep.subr.mxu0 %v459
    %497 = vmatpush1.msra.mxu0 %v458
    %498 = vmatprep.subr.mxu0 %v457
    %499 = vmatpush1.msra.mxu0 %v456
    %500 = vmatprep.subr.mxu0 %v455
    %501 = vmatpush1.msra.mxu0 %v454
    %502 = vmatprep.subr.mxu0 %v453
    %503 = vmatpush1.msra.mxu0 %v452
    %504 = vmatprep.subr.mxu0 %v451
    %505 = vmatpush1.msra.mxu0 %v450
    %506 = vmatprep.subr.mxu0 %v449
    %507 = vmatpush1.msra.mxu0 %v448
    %508 = vmatprep.subr.mxu0 %v447
    %509 = vmatpush1.msra.mxu0 %v446
    %510 = vmatprep.subr.mxu0 0.0
    %511 = vmatpush2.msra.mxu0 0.0
    %512 = vmatprep.subr.mxu0 0.0
    %513 = vmatpush2.msra.mxu0 0.0
    %514 = vmatprep.subr.mxu0 0.0
    %515 = vmatpush2.msra.mxu0 0.0
    %516 = vmatprep.subr.mxu0 0.0
    %517 = vmatpush2.msra.mxu0 0.0
    %518 = vmatprep.subr.mxu0 0.0
    %519 = vmatpush2.msra.mxu0 0.0
    %520 = vmatprep.subr.mxu0 0.0
    %521 = vmatpush2.msra.mxu0 0.0
    %522 = vmatprep.subr.mxu0 0.0
    %523 = vmatpush2.msra.mxu0 0.0
    %524 = vmatprep.subr.mxu0 0.0
    %525 = vmatpush2.msra.mxu0 0.0
    %526 = vmatprep.subr.mxu0 0.0
    %527 = vmatpush2.msra.mxu0 0.0
    %528 = vmatprep.subr.mxu0 0.0
    %529 = vmatpush2.msra.mxu0 0.0
    %530 = vmatprep.subr.mxu0 0.0
    %531 = vmatpush2.msra.mxu0 0.0
    %532 = vmatprep.subr.mxu0 0.0
    %533 = vmatpush2.msra.mxu0 0.0
    %534 = vmatprep.subr.mxu0 0.0
    %535 = vmatpush2.msra.mxu0 0.0
    %536 = vmatprep.subr.mxu0 0.0
    %537 = vmatpush2.msra.mxu0 0.0
    %538 = vmatprep.subr.mxu0 0.0
    %539 = vmatpush2.msra.mxu0 0.0
    %540 = vmatprep.subr.mxu0 0.0
    %541 = vmatpush2.msra.mxu0 0.0
    %542 = vmatprep.mubr.f32.mxu0 0.0
    %543 = vmatmul.mubr.f32.gmra.mxu0 %v54
    %v544 = vpop.f32.mrf.mxu0
    %v545 = vadd.f32 0.0, %v544
    %v546 = vpop.f32.mrf.mxu0
    %v547 = vadd.f32 0.0, %v546
    %548 = vdwg.mxu0
    %v549 = vstv %s55
    %v550 = vadd.f32 %v545, %v549
    %v551 = vadd.f32 %v547, %v549
    %v552 = vxor.u32 %v550, 2147483648
    %v553 = vxor.u32 %v551, 2147483648
    %v554 = vmul.f32 %v552, 1.442695
    %v555 = vpow.pop %v554
    %v556 = vmul.f32 %v553, 1.442695
    %v557 = vpow.pop %v556
    %v558 = vadd.f32 %v555, 1.0
    %v559 = vadd.f32 %v557, 1.0
    %v560 = vrcp.pop %v558
    %v561 = vmul.f32 1.0, %v560
    %v562 = vrcp.pop %v559
    %v563 = vmul.f32 1.0, %v562
    %v566 = vcombine.low %v561, %v563
    %v568 = vunpack.c.l.s4 1966171168
    %v569 = vunpack.c.0.s8 %v568
    %v570 = vlaneseq
    %v571 = vshrl.u32 %v570, 7
    %v572 = vsub.s32 %v569, %v571
    %v573 = vrot.slane %v566, %v572
    %v575 = vunpack.c.l.s4 1966171168
    %v576 = vunpack.c.0.s8 %v575
    %v577 = vlaneseq
    %v578 = vshrl.u32 %v577, 7
    %v579 = vsub.s32 %v576, %v578
    %v580 = vrot.slane %v573, %v579
    %v582 = vlaneseq
    %vm583 = vcmp.ge.s32.totalorder %v582, 0
    %vm584 = vcmp.lt.s32.totalorder %v582, 256
    %vm585 = vmand %vm583, %vm584
    %586 = vst.msk [vmem:[#allocation3] sm:$0x3] %vm585, %v580
    // Predicated region
    $region22: #{tpu_custom_call.1} parent=1 // pred_check
      _
    $region23: #{tpu_custom_call.1} parent=1 // pred_check_branch
      %588 = sbr.rel (0) target = $region25
    $region24: #{tpu_custom_call.1} parent=1 // pred_region
      %s590 = ssub.s32 32, 32
      %591 = vsyncadd [#allocation4], %s590
      %s593 = sshll.u32 [#allocation3], 4
      %s594 = int_to_ptr.vmem [resolvable:$true] %s593
      %596 = dma.vmem_to_hbm [thread:$0]  %s594, 32, %s5, [#allocation4]
    $region25: #{tpu_custom_call.1} parent=1 // pred_fallthru
      _
    // Predicated region
    $region26: #{tpu_custom_call.1} parent=1 // pred_check
      _
    $region27: #{tpu_custom_call.1} parent=1 // pred_check_branch
      %598 = sbr.rel (0) target = $region29
    $region28: #{tpu_custom_call.1} parent=1 // pred_region
      %599 = dma.done [#allocation4], 32
    $region29: #{tpu_custom_call.1} parent=1 // pred_fallthru
      _
    %600 = vsyncpa [#allocation4], 1

</llo_original>
